<compile_context>
chip_gen: v7x
topology: tpu7x:2x2x1
jax: 0.10.0
libtpu: 0.0.40
codegen_flags: <defaults>
</compile_context>

<pallas_src>
import functools

import jax
import jax.numpy as jnp
from jax.experimental import pallas as pl
from jax.experimental.pallas import tpu as pltpu

_LANES = 128
_SUBLANE_PACK = 32                       # covers f32 (8), bf16 (16) and int8 (32) tiling
_MIN_TILE = _LANES * _SUBLANE_PACK       # 4096 elems: one packing-aligned slab
_MAX_TILE = 512 * 1024                   # elems / grid step (~2.5 MiB streamed w/ i8 labels)
_FAST_PATH_MAX_ELEMS = 128 * 1024        # below this, fused XLA beats a pallas_call
_VMEM_LIMIT = 48 * 1024 * 1024           # fits v7x's 64 MiB VMEM with headroom


def _round_up(x, m):
    return ((x + m - 1) // m) * m


def _contrastive_loss_kernel(dist_ref, lab_ref, out_ref, *, eps):
    """One grid step: per-lane partial loss sums for a [TR, 128] slab."""
    d = dist_ref[...].astype(jnp.float32)      # [TR, 128]
    lab = lab_ref[...].astype(jnp.float32)     # [TR, 128]
    pos = jnp.maximum(eps - d, 0.0)
    loss = (1.0 - lab) * d * d + lab * pos * pos
    # Cross-sublane reduce only; the final 128-lane reduce is done in the wrapper.
    out_ref[...] = jnp.sum(loss, axis=0, keepdims=True).reshape(1, 1, _LANES)


def contrastive_loss(distances, labels, *, reduction="mean", eps=1e-4,
                     max_tile_elems=_MAX_TILE, use_fast_path=None):
    """Pallas TPU implementation of ContrastiveLoss.forward."""
    if reduction not in ("mean", "sum"):
        raise ValueError(f"unsupported reduction: {reduction!r}")

    distances = jnp.asarray(distances)
    labels = jnp.asarray(labels)
    if distances.ndim == 1:
        distances = distances[:, None]
    if labels.ndim == 1:
        labels = labels[:, None]

    C = labels.shape[-1]
    if C > 1:
        # torch.argmax(labels, -1).reshape(-1, 1); streamed in a narrow dtype.
        # This fuses with the pad/reshape below -- no standalone HBM copy.
        idx = jnp.argmax(labels, axis=-1).reshape(-1, 1)
        lab = idx.astype(jnp.int8) if C <= 127 else idx.astype(jnp.int32)
    else:
        lab = labels

    # PyTorch broadcasting of [B, 1] labels against [B, K] distances.
    lab_full = jnp.broadcast_to(lab, distances.shape)
    n = distances.size                          # true element count (mean denominator)

    if use_fast_path is None:
        use_fast_path = n <= _FAST_PATH_MAX_ELEMS
    if use_fast_path:
        d32 = distances.astype(jnp.float32)
        l32 = lab_full.astype(jnp.float32)
        loss = (1.0 - l32) * d32 * d32 + l32 * jnp.maximum(eps - d32, 0.0) ** 2
        return loss.mean() if reduction == "mean" else loss.sum()

    # Lane-dense layout; zero tail padding contributes exactly 0 loss.
    tb = min(_round_up(n, _MIN_TILE), _round_up(int(max_tile_elems), _MIN_TILE))
    n_pad = _round_up(n, tb)
    num_tiles = n_pad // tb
    tr = tb // _LANES                           # rows per tile (multiple of 32)
    rows = n_pad // _LANES

    d_slab = jnp.pad(distances.reshape(-1), (0, n_pad - n)).reshape(rows, _LANES)
    lab_slab = jnp.pad(lab_full.reshape(-1), (0, n_pad - n)).reshape(rows, _LANES)

    kernel = functools.partial(_contrastive_loss_kernel, eps=float(eps))

    bytes_accessed = int(d_slab.size * d_slab.dtype.itemsize
                         + lab_slab.size * lab_slab.dtype.itemsize
                         + num_tiles * _LANES * 4)
    cost = pl.CostEstimate(flops=int(8 * n_pad), transcendentals=0,
                           bytes_accessed=bytes_accessed)

    partials = pl.pallas_call(
        kernel,
        out_shape=jax.ShapeDtypeStruct((num_tiles, 1, _LANES), jnp.float32),
        grid=(num_tiles,),
        in_specs=[
            pl.BlockSpec((tr, _LANES), lambda i: (i, 0)),
            pl.BlockSpec((tr, _LANES), lambda i: (i, 0)),
        ],
        out_specs=pl.BlockSpec((1, 1, _LANES), lambda i: (i, 0, 0)),
        compiler_params=pltpu.CompilerParams(
            # Per-tile independent outputs: megacore shards tiles on v7x.
            dimension_semantics=("parallel",),
            vmem_limit_bytes=_VMEM_LIMIT,
        ),
        cost_estimate=cost,
    )(d_slab, lab_slab)

    total = jnp.sum(partials)
    if reduction == "mean":
        return total / jnp.float32(n)
    return total


def _reference(distances, labels, *, reduction="mean", eps=1e-4):
    distances = jnp.asarray(distances, dtype=jnp.float32)
    labels = jnp.asarray(labels, dtype=jnp.float32)
    if labels.shape[-1] > 1:
        labels = jnp.argmax(labels, axis=-1).reshape(-1, 1).astype(jnp.float32)
    loss = (1 - labels) * distances ** 2 + labels * jnp.clip(eps - distances, 0.0) ** 2
    return loss.mean() if reduction == "mean" else loss.sum()


if __name__ == "__main__":
    key = jax.random.PRNGKey(0)
    k1, k2, k3, k4, k5, k6 = jax.random.split(key, 6)

    # Typical reward-model use: [B, 1] distances, one-hot labels. Small shape,
    # but force the Pallas path so the kernel itself is exercised.
    B, C = 8, 2
    distances = jnp.abs(jax.random.normal(k1, (B, 1), dtype=jnp.float32))
    cls = jax.random.randint(k2, (B,), 0, C)
    labels = jax.nn.one_hot(cls, C, dtype=jnp.float32)

    out = jax.block_until_ready(
        contrastive_loss(distances, labels, reduction="mean", eps=1e-4,
                         use_fast_path=False))
    ref = _reference(distances, labels, reduction="mean", eps=1e-4)
    assert jnp.allclose(out, ref, atol=1e-6, rtol=1e-5), (out, ref)

    out_sum = jax.block_until_ready(
        contrastive_loss(distances, labels, reduction="sum", eps=1e-4,
                         use_fast_path=False))
    ref_sum = _reference(distances, labels, reduction="sum", eps=1e-4)
    assert jnp.allclose(out_sum, ref_sum, atol=1e-5, rtol=1e-5), (out_sum, ref_sum)

    # Auto fast path (small batch -> fused XLA) agrees with the kernel path.
    out_fast = jax.block_until_ready(contrastive_loss(distances, labels))
    assert jnp.allclose(out_fast, ref, atol=1e-6, rtol=1e-5), (out_fast, ref)

    # Multi-tile + ragged tail + per-tile "parallel" partial sums.
    B2 = 10_000
    d2 = jnp.abs(jax.random.normal(k3, (B2, 1), dtype=jnp.float32))
    cls2 = jax.random.randint(k4, (B2,), 0, C)
    l2 = jax.nn.one_hot(cls2, C, dtype=jnp.float32)
    out2 = jax.block_until_ready(
        contrastive_loss(d2, l2, reduction="mean", eps=1e-4,
                         max_tile_elems=4096, use_fast_path=False))
    ref2 = _reference(d2, l2, reduction="mean", eps=1e-4)
    assert jnp.allclose(out2, ref2, atol=1e-6, rtol=1e-4), (out2, ref2)

    # Single-column labels broadcast against [B, K] distances (C == 1 path).
    Bk, K = 64, 3
    dk = jax.random.normal(k5, (Bk, K), dtype=jnp.float32)
    lk = (jax.random.uniform(k6, (Bk, 1)) > 0.5).astype(jnp.float32)
    outk = jax.block_until_ready(
        contrastive_loss(dk, lk, reduction="mean", eps=1e-4, use_fast_path=False))
    refk = _reference(dk, lk, reduction="mean", eps=1e-4)
    assert jnp.allclose(outk, refk, atol=1e-6, rtol=1e-5), (outk, refk)

    print("KERNEL_OK")
</pallas_src>

<mosaic_0001>
module attributes {stable_mosaic.version = 11 : i64} {
  func.func @_contrastive_loss_kernel(%arg0: i32, %arg1: memref<32x128xf32, #tpu.memory_space<vmem>>, %arg2: memref<32x128xi8, #tpu.memory_space<vmem>>, %arg3: memref<1x1x128xf32, #tpu.memory_space<vmem>>) attributes {dimension_semantics = [#tpu.dimension_semantics<parallel>], iteration_bounds = array<i64: 1>, scalar_prefetch = 0 : i64, scratch_operands = 0 : i64, tpu.core_type = #tpu.core_type<tc>, window_params = [{transform_indices = @transform_0, window_bounds = array<i64: 32, 128>}, {transform_indices = @transform_1, window_bounds = array<i64: 32, 128>}, {transform_indices = @transform_2, window_bounds = array<i64: 1, 1, 128>}]} {
    %c0 = arith.constant 0 : index
    %c0_0 = arith.constant 0 : index
    %0 = vector.load %arg1[%c0, %c0_0] : memref<32x128xf32, #tpu.memory_space<vmem>>, vector<32x128xf32>
    %c0_1 = arith.constant 0 : index
    %c0_2 = arith.constant 0 : index
    %1 = vector.load %arg2[%c0_1, %c0_2] : memref<32x128xi8, #tpu.memory_space<vmem>>, vector<32x128xi8>
    %2 = arith.sitofp %1 : vector<32x128xi8> to vector<32x128xf32>
    %cst = arith.constant 9.99999974E-5 : f32
    %3 = vector.broadcast %cst : f32 to vector<32x128xf32>
    %4 = arith.subf %3, %0 : vector<32x128xf32>
    %cst_3 = arith.constant 0.000000e+00 : f32
    %5 = vector.broadcast %cst_3 : f32 to vector<32x128xf32>
    %6 = arith.maximumf %4, %5 : vector<32x128xf32>
    %cst_4 = arith.constant 1.000000e+00 : f32
    %7 = vector.broadcast %cst_4 : f32 to vector<32x128xf32>
    %8 = arith.subf %7, %2 : vector<32x128xf32>
    %9 = arith.mulf %8, %0 : vector<32x128xf32>
    %10 = arith.mulf %9, %0 : vector<32x128xf32>
    %11 = arith.mulf %2, %6 : vector<32x128xf32>
    %12 = arith.mulf %11, %6 : vector<32x128xf32>
    %13 = arith.addf %10, %12 : vector<32x128xf32>
    %cst_5 = arith.constant dense<0.000000e+00> : vector<128xf32>
    %14 = vector.multi_reduction <add>, %13, %cst_5 [0] : vector<32x128xf32> to vector<128xf32>
    %15 = vector.shape_cast %14 : vector<128xf32> to vector<1x128xf32>
    %16 = vector.shape_cast %15 : vector<1x128xf32> to vector<1x1x128xf32>
    %c0_6 = arith.constant 0 : index
    %c0_7 = arith.constant 0 : index
    %c0_8 = arith.constant 0 : index
    %17 = vector.load %arg3[%c0_6, %c0_7, %c0_8] : memref<1x1x128xf32, #tpu.memory_space<vmem>>, vector<1x1x128xf32>
    tpu.vector_store %arg3[%c0_6, %c0_7, %c0_8], %16 {strides = array<i32>} : memref<1x1x128xf32, #tpu.memory_space<vmem>>, vector<1x1x128xf32>,
    return
  }
  func.func @transform_0(%arg0: i32) -> (i32, i32) {
    %c0_i32 = arith.constant 0 : i32
    %c0_i32_0 = arith.constant 0 : i32
    return %arg0, %c0_i32 : i32, i32
  }
  func.func @transform_1(%arg0: i32) -> (i32, i32) {
    %c0_i32 = arith.constant 0 : i32
    %c0_i32_0 = arith.constant 0 : i32
    return %arg0, %c0_i32 : i32, i32
  }
  func.func @transform_2(%arg0: i32) -> (i32, i32, i32) {
    %c0_i32 = arith.constant 0 : i32
    %c0_i32_0 = arith.constant 0 : i32
    %c0_i32_1 = arith.constant 0 : i32
    return %arg0, %c0_i32, %c0_i32_0 : i32, i32, i32
  }
}

</mosaic_0001>

<llo_original>
// kernel: tpu_custom_call.1
$region0: #{tpu_custom_call.1}
  #allocation0 [shape = 'u32[]', space=smem, size = 0x4, offset = 0x4, fixed_abs, tag = 'smem constant byte address 0x4 - core index']
  #allocation1 [shape = 'u32[144,128]{1,0:T(1,128)}', space=vmem, size = 0x12000, scoped, tag = 'internal scratch']
  %s0 = inlined_call_operand.hbm [shape: f32[32,128], index: 0, kind: input, shape index: {}]
  %s1 = inlined_call_operand.hbm [shape: s8[32,128], index: 1, kind: input, shape index: {}]
  %s2 = inlined_call_operand.hbm [shape: f32[1,1,128], index: 2, kind: output, shape index: {}]
  %s3 = sld [smem:[#allocation0]]
  $region26: #{tpu_custom_call.1} parent=0
    _
  %s5 = ssub.s32 1, %s3
  %s6 = scalar_select 0, %s5, %s3
  $region1: #{tpu_custom_call.1} parent=0
    #allocation2 [shape = 'u8[16384]{0}', space=vmem, size = 0x4000, scoped, tag = 'input window, operand 0, single buffered']
    #allocation3 [shape = 's32[1]{0}', space=sflag, size = 0x4, scoped, tag = 'scoped memory for tpu_custom_call.1']
    #allocation4 [shape = 's32[1]{0}', space=sflag, size = 0x4, scoped, tag = 'scoped memory for tpu_custom_call.1']
    #allocation5 [shape = 'u8[4096]{0}', space=vmem, size = 0x1000, scoped, tag = 'input window, operand 1, single buffered']
    #allocation6 [shape = 's32[1]{0}', space=sflag, size = 0x4, scoped, tag = 'scoped memory for tpu_custom_call.1']
    #allocation7 [shape = 'u8[512]{0}', space=vmem, size = 0x400, scoped, tag = 'output window, operand 0, single buffered']
    %7 = vsyncpa [#allocation3], 0
    %8 = vsyncpa [#allocation6], 0
    %9 = vsyncpa [#allocation4], 0
    // Predicated region
    $region2: #{tpu_custom_call.1} parent=1 // pred_check
      _
    $region3: #{tpu_custom_call.1} parent=1 // pred_check_branch
      %11 = sbr.rel (0) target = $region5
    $region4: #{tpu_custom_call.1} parent=1 // pred_region
      %s13 = ssub.s32 512, 512
      %14 = vsyncadd [#allocation3], %s13
      %s15 = sshll.u32 [#allocation2], 4
      %s16 = int_to_ptr.vmem [resolvable:$true] %s15
      %21 = dma.hbm_to_vmem [thread:$0]  %s0, 512, %s16, [#allocation3], 128, 128, 8
    $region5: #{tpu_custom_call.1} parent=1 // pred_fallthru
      _
    // Predicated region
    $region6: #{tpu_custom_call.1} parent=1 // pred_check
      _
    $region7: #{tpu_custom_call.1} parent=1 // pred_check_branch
      %23 = sbr.rel (0) target = $region9
    $region8: #{tpu_custom_call.1} parent=1 // pred_region
      %s25 = ssub.s32 128, 128
      %26 = vsyncadd [#allocation6], %s25
      %s28 = sshll.u32 [#allocation5], 4
      %s29 = int_to_ptr.vmem [resolvable:$true] %s28
      %31 = dma.hbm_to_vmem [thread:$0]  %s1, 128, %s29, [#allocation6]
    $region9: #{tpu_custom_call.1} parent=1 // pred_fallthru
      _
    // Predicated region
    $region10: #{tpu_custom_call.1} parent=1 // pred_check
      _
    $region11: #{tpu_custom_call.1} parent=1 // pred_check_branch
      %33 = sbr.rel (0) target = $region13
    $region12: #{tpu_custom_call.1} parent=1 // pred_region
      %34 = dma.done [#allocation3], 512
    $region13: #{tpu_custom_call.1} parent=1 // pred_fallthru
      _
    // Predicated region
    $region14: #{tpu_custom_call.1} parent=1 // pred_check
      _
    $region15: #{tpu_custom_call.1} parent=1 // pred_check_branch
      %36 = sbr.rel (0) target = $region17
    $region16: #{tpu_custom_call.1} parent=1 // pred_region
      %37 = dma.done [#allocation6], 128
    $region17: #{tpu_custom_call.1} parent=1 // pred_fallthru
      _
    %v38 = vld [vmem:[#allocation2] sm:$0xff]
    %v39 = vld [vmem:[#allocation2 + $0x8] sm:$0xff]
    %v40 = vld [vmem:[#allocation2 + $0x10] sm:$0xff]
    %v41 = vld [vmem:[#allocation2 + $0x18] sm:$0xff]
    %v42 = vld [vmem:[#allocation5] sm:$0xff]
    %v43 = vunpack.c.0.s8 %v42
    %v44 = vunpack.c.1.s8 %v42
    %v45 = vunpack.c.2.s8 %v42
    %v46 = vunpack.c.3.s8 %v42
    %v47 = vcvt.s32.f32 %v43
    %v48 = vcvt.s32.f32 %v44
    %v49 = vcvt.s32.f32 %v45
    %v50 = vcvt.s32.f32 %v46
    %v51 = vsub.f32 0.0001, %v38
    %v52 = vsub.f32 0.0001, %v39
    %v53 = vsub.f32 0.0001, %v40
    %v54 = vsub.f32 0.0001, %v41
    %v55 = vmax.f32 %v51, 0.0
    %v56 = vmax.f32 %v52, 0.0
    %v57 = vmax.f32 %v53, 0.0
    %v58 = vmax.f32 %v54, 0.0
    %v59 = vsub.f32 1.0, %v47
    %v60 = vsub.f32 1.0, %v48
    %v61 = vsub.f32 1.0, %v49
    %v62 = vsub.f32 1.0, %v50
    %v63 = vmul.f32 %v59, %v38
    %v64 = vmul.f32 %v60, %v39
    %v65 = vmul.f32 %v61, %v40
    %v66 = vmul.f32 %v62, %v41
    %v67 = vmul.f32 %v63, %v38
    %v68 = vmul.f32 %v64, %v39
    %v69 = vmul.f32 %v65, %v40
    %v70 = vmul.f32 %v66, %v41
    %v71 = vmul.f32 %v47, %v55
    %v72 = vmul.f32 %v48, %v56
    %v73 = vmul.f32 %v49, %v57
    %v74 = vmul.f32 %v50, %v58
    %v75 = vmul.f32 %v71, %v55
    %v76 = vmul.f32 %v72, %v56
    %v77 = vmul.f32 %v73, %v57
    %v78 = vmul.f32 %v74, %v58
    %v79 = vadd.f32 %v67, %v75
    %v80 = vadd.f32 %v68, %v76
    %v81 = vadd.f32 %v69, %v77
    %v82 = vadd.f32 %v70, %v78
    %v83 = vadd.f32 %v79, %v80
    %v84 = vadd.f32 %v83, %v81
    %v85 = vadd.f32 %v84, %v82
    %v86 = vrot.slane %v85, 4
    %v87 = vadd.f32 %v85, %v86
    %v88 = vrot.slane %v87, 2
    %v89 = vadd.f32 %v87, %v88
    %v90 = vrot.slane %v89, 1
    %v91 = vadd.f32 %v89, %v90
    %92 = vst [vmem:[#allocation7] sm:$0x1] %v91
    // Predicated region
    $region18: #{tpu_custom_call.1} parent=1 // pred_check
      _
    $region19: #{tpu_custom_call.1} parent=1 // pred_check_branch
      %94 = sbr.rel (0) target = $region21
    $region20: #{tpu_custom_call.1} parent=1 // pred_region
      %s96 = ssub.s32 16, 16
      %97 = vsyncadd [#allocation4], %s96
      %s99 = sshll.u32 [#allocation7], 4
      %s100 = int_to_ptr.vmem [resolvable:$true] %s99
      %102 = dma.vmem_to_hbm [thread:$0]  %s100, 16, %s2, [#allocation4]
    $region21: #{tpu_custom_call.1} parent=1 // pred_fallthru
      _
    // Predicated region
    $region22: #{tpu_custom_call.1} parent=1 // pred_check
      _
    $region23: #{tpu_custom_call.1} parent=1 // pred_check_branch
      %104 = sbr.rel (0) target = $region25
    $region24: #{tpu_custom_call.1} parent=1 // pred_region
      %105 = dma.done [#allocation4], 16
    $region25: #{tpu_custom_call.1} parent=1 // pred_fallthru
      _
    %106 = vsyncpa [#allocation3], 1
    %107 = vsyncpa [#allocation6], 1
    %108 = vsyncpa [#allocation4], 1

</llo_original>
